<compile_context>
chip_gen: v5e
topology: v5e:2x2
jax: 0.10.0
libtpu: 0.0.40
codegen_flags: <defaults>
</compile_context>

<pallas_src>
import functools
import math

import numpy as np
import jax
import jax.numpy as jnp
from jax.experimental import pallas as pl
from jax.experimental.pallas import tpu as pltpu


def _cdiv(a, b):
    return -(-a // b)


def _sinpos_kernel(consts_ref, rows_ref, out_ref, *, tile_r, pack_k, apply_pad,
                   pad_tile, pad_local_row, pad_lane_lo, pad_lane_hi):
    """Writes one [tile_r, W] tile of the lane-packed sinusoidal table.

    Packed element (r, c) holds table[r*k + c//D, c%D]:
        pos   = (tile_off + r)*k + m[c]     (exact integer arithmetic in f32)
        angle = pos * inv_freq[c]           (single rounding -> matches reference)
        value = cos(angle) on cos lanes, sin(angle) on sin lanes, 0 on odd-D tail.

    consts_ref: (3, W) f32 -- row0 = inv_freq, row1 = in-pack offset m,
                              row2 = cos-lane flag (1.0 on cos lanes).
    rows_ref:   (tile_r, 1) f32 -- local packed-row index 0..tile_r-1.
    """
    inv_lane = consts_ref[0:1, :]                     # (1, W)
    m_lane = consts_ref[1:2, :]                       # (1, W)
    is_cos = consts_ref[2:3, :] > 0.5                 # (1, W), evaluated once per tile

    # Fold the global packed-row offset of this tile into a per-tile (1, W) bias.
    tile_pos0 = (pl.program_id(0) * (tile_r * pack_k)).astype(jnp.float32)
    per_tile = m_lane + tile_pos0                     # exact integers in f32

    pos_col = rows_ref[...] * jnp.float32(pack_k)     # (tile_r, 1): r*k, exact
    pos = pos_col + per_tile                          # (tile_r, W): exact integer positions (< 2^24)
    angle = pos * inv_lane                            # single rounding -- bit-matches pos*inv of the reference
    emb = jnp.where(is_cos, jnp.cos(angle), jnp.sin(angle))
    out_ref[...] = emb.astype(out_ref.dtype)

    if apply_pad:
        # Overwrite only the padded sub-row, only on the tile that contains it.
        @pl.when(pl.program_id(0) == pad_tile)
        def _():
            out_ref[pad_local_row:pad_local_row + 1, pad_lane_lo:pad_lane_hi] = (
                jnp.zeros((1, pad_lane_hi - pad_lane_lo), out_ref.dtype))


@functools.lru_cache(maxsize=None)
def sinusoidal_positional_embedding(seq_len, embedding_dim, padding_idx):
    """Returns the (1, seq_len, embedding_dim) sinusoidal table (float32).

    Cached per (seq_len, embedding_dim, padding_idx): repeated forwards reuse
    the already-built device array instead of re-running the kernel.
    """
    D = int(embedding_dim)
    seq_len = int(seq_len)
    half = D // 2
    if half < 2:
        # The torch reference divides by (half_dim - 1); D in {1,2,3} is degenerate.
        raise ValueError("embedding_dim must be >= 4 for SinusoidalPositionalEmbedding")
    if seq_len < 1:
        raise ValueError("seq_len must be >= 1")

    # ---- lane packing: pack k positions per packed row of width W = k*D so the
    # output's last dim is a multiple of 128 (unmasked full-lane stores).
    if D % 128 == 0:
        k = 1                                   # already lane-dense
    else:
        lcm = D * 128 // math.gcd(D, 128)
        k = (lcm // D) if lcm <= 512 else 1     # lcm-packing fallback; k=1 -> masked stores
    W = k * D
    R = _cdiv(seq_len, k)                        # packed rows needed to cover seq_len
    S_pad = R * k

    # ---- host-precomputed per-lane constants (identical math to the reference).
    scale = math.log(10000.0) / (half - 1)
    inv = np.exp(np.arange(half, dtype=np.float32) * np.float32(-scale)).astype(np.float32)
    inv_lane = np.zeros((W,), np.float32)
    m_lane = np.zeros((W,), np.float32)
    cos_lane = np.zeros((W,), np.float32)
    for m in range(k):
        b = m * D
        inv_lane[b:b + half] = inv                     # sin block
        inv_lane[b + half:b + 2 * half] = inv          # cos block (same freqs)
        m_lane[b:b + 2 * half] = np.float32(m)
        cos_lane[b + half:b + 2 * half] = 1.0
        # odd-D trailing lane keeps inv = 0 -> sin(0) = 0
    consts = jnp.asarray(np.stack([inv_lane, m_lane, cos_lane], axis=0))   # (3, W)

    # ---- tile sizing over the packed-row axis.
    bytes_per_row = W * 4
    target_tile_bytes = 4 << 20      # double-buffered ~8 MiB: safe on v5e/v6e/v7x defaults
    max_rows = max(8, (target_tile_bytes // bytes_per_row) // 8 * 8)
    if R <= 8:
        tile_r, n_tiles = R, 1                             # full-extent single block
    else:
        # >= 2 tiles whenever there is enough work, so v7x megacore gets both TCs.
        want = max(_cdiv(R, max_rows), 2 if R >= 16 else 1)
        tile_r = _cdiv(_cdiv(R, want), 8) * 8
        if tile_r >= R:
            tile_r, n_tiles = R, 1
        else:
            n_tiles = _cdiv(R, tile_r)                     # trailing block may be partial;
                                                           # Pallas masks its OOB writeback.

    rows = jnp.arange(tile_r, dtype=jnp.float32).reshape(tile_r, 1)   # local row column

    # ---- padding-row zeroing, gated to the single tile that contains it.
    apply_pad = (padding_idx is not None) and (0 <= padding_idx < seq_len)
    if apply_pad:
        pr = padding_idx // k
        pad_tile = pr // tile_r
        pad_local_row = pr - pad_tile * tile_r
        pad_lane_lo = (padding_idx % k) * D
        pad_lane_hi = pad_lane_lo + D
    else:
        pad_tile = pad_local_row = pad_lane_lo = pad_lane_hi = 0

    kernel = functools.partial(
        _sinpos_kernel, tile_r=tile_r, pack_k=k, apply_pad=apply_pad,
        pad_tile=pad_tile, pad_local_row=pad_local_row,
        pad_lane_lo=pad_lane_lo, pad_lane_hi=pad_lane_hi)

    packed = pl.pallas_call(
        kernel,
        out_shape=jax.ShapeDtypeStruct((R, W), jnp.float32),   # exact R: no row slice afterwards
        grid_spec=pltpu.PrefetchScalarGridSpec(
            num_scalar_prefetch=0,
            grid=(n_tiles,),
            in_specs=[
                pl.BlockSpec((3, W), lambda i: (0, 0)),        # constant index map -> DMA'd once
                pl.BlockSpec((tile_r, 1), lambda i: (0, 0)),   # local row column, DMA'd once
            ],
            out_specs=pl.BlockSpec((tile_r, W), lambda i: (i, 0)),
        ),
        compiler_params=pltpu.CompilerParams(
            dimension_semantics=("parallel",)),
    )(consts, rows)

    # Undo the lane packing: packed[r, m*D + f] == table[r*k + m, f], so a
    # row-major reshape recovers the logical table; slice only when needed.
    table = packed.reshape(S_pad, D)
    if S_pad != seq_len:                  # only when seq_len % k != 0
        table = table[:seq_len]
    return table[None, :, :]              # unsqueeze(0) -> (1, seq_len, D)


class SinusoidalPositionalEmbedding:
    """Mirror of the torch module: caches weights up to a capacity, grows lazily."""

    def __init__(self, embedding_dim, padding_idx, init_size=1024):
        self.embedding_dim = int(embedding_dim)
        self.padding_idx = padding_idx
        self._capacity = max(int(init_size), 1)
        self.weights = sinusoidal_positional_embedding(
            self._capacity, self.embedding_dim, self.padding_idx)

    def forward(self, x, **kwargs):
        _, seq_len, _ = x.shape
        if seq_len > self._capacity:
            self._capacity = int(seq_len)
            self.weights = sinusoidal_positional_embedding(
                self._capacity, self.embedding_dim, self.padding_idx)
        if seq_len == self._capacity:
            return self.weights
        return self.weights[:, :seq_len, :]

    __call__ = forward

    def max_positions(self):
        return int(100000.0)


def reference_numpy(seq_len, embedding_dim, padding_idx):
    half = embedding_dim // 2
    scale = math.log(10000.0) / (half - 1)
    inv = np.exp(np.arange(half, dtype=np.float32) * np.float32(-scale)).astype(np.float32)
    ang = (np.arange(seq_len, dtype=np.float32)[:, None] * inv[None, :]).astype(np.float32)
    emb = np.concatenate([np.sin(ang), np.cos(ang)], axis=1).astype(np.float32)
    if embedding_dim % 2 == 1:
        emb = np.concatenate([emb, np.zeros((seq_len, 1), np.float32)], axis=1)
    if padding_idx is not None:
        emb[padding_idx, :] = 0.0
    return emb[None]


if __name__ == "__main__":
    # Module config: embedding_dim=32, padding_idx=0.
    embedding_dim = 32
    padding_idx = 0

    # Example input consistent with forward(): (bsz, seq_len, embedding_dim).
    key = jax.random.PRNGKey(0)
    bsz, seq_len = 2, 8
    x = jax.random.normal(key, (bsz, seq_len, embedding_dim), dtype=jnp.float32)

    mod = SinusoidalPositionalEmbedding(embedding_dim, padding_idx, init_size=seq_len)
    out = jax.block_until_ready(mod(x))
    assert out.shape == (1, seq_len, embedding_dim), out.shape
    np.testing.assert_allclose(np.asarray(out),
                               reference_numpy(seq_len, embedding_dim, padding_idx),
                               rtol=1e-5, atol=1e-5)

    # Larger spot check (positions up to 498): exercises the multi-tile grid,
    # the partial trailing block, the column slice (499 % 4 != 0) and the
    # exact-position angle path.  Loose tolerance absorbs libm-vs-TPU sin/cos
    # range-reduction differences at large arguments.
    big_len = 499
    big = jax.block_until_ready(
        sinusoidal_positional_embedding(big_len, embedding_dim, padding_idx))
    assert big.shape == (1, big_len, embedding_dim), big.shape
    np.testing.assert_allclose(np.asarray(big),
                               reference_numpy(big_len, embedding_dim, padding_idx),
                               rtol=2e-4, atol=2e-4)

    print("KERNEL_OK")
</pallas_src>

<mosaic_0001>
module attributes {stable_mosaic.version = 11 : i64} {
  func.func @_sinpos_kernel(%arg0: i32, %arg1: memref<3x128xf32, #tpu.memory_space<vmem>>, %arg2: memref<2x1xf32, #tpu.memory_space<vmem>>, %arg3: memref<2x128xf32, #tpu.memory_space<vmem>>) attributes {dimension_semantics = [#tpu.dimension_semantics<parallel>], iteration_bounds = array<i64: 1>, scalar_prefetch = 0 : i64, scratch_operands = 0 : i64, tpu.core_type = #tpu.core_type<tc>, window_params = [{pipeline_mode = #tpu.pipeline_mode<synchronous>, transform_indices = @transform_0, window_bounds = array<i64: 3, 128>}, {pipeline_mode = #tpu.pipeline_mode<synchronous>, transform_indices = @transform_1, window_bounds = array<i64: 2, 1>}, {transform_indices = @transform_2, window_bounds = array<i64: 2, 128>}]} {
    %c0 = arith.constant 0 : index
    %c0_0 = arith.constant 0 : index
    %0 = vector.load %arg1[%c0, %c0_0] : memref<3x128xf32, #tpu.memory_space<vmem>>, vector<1x128xf32>
    %c1 = arith.constant 1 : index
    %c0_1 = arith.constant 0 : index
    %1 = vector.load %arg1[%c1, %c0_1] : memref<3x128xf32, #tpu.memory_space<vmem>>, vector<1x128xf32>
    %c2 = arith.constant 2 : index
    %c0_2 = arith.constant 0 : index
    %2 = vector.load %arg1[%c2, %c0_2] : memref<3x128xf32, #tpu.memory_space<vmem>>, vector<1x128xf32>
    %cst = arith.constant 5.000000e-01 : f32
    %3 = vector.broadcast %cst : f32 to vector<1x128xf32>
    %4 = arith.cmpf ogt, %2, %3 : vector<1x128xf32>
    %c8_i32 = arith.constant 8 : i32
    %5 = arith.muli %arg0, %c8_i32 : i32
    %6 = arith.sitofp %5 : i32 to f32
    %7 = vector.broadcast %6 : f32 to vector<1x128xf32>
    %8 = arith.addf %1, %7 : vector<1x128xf32>
    %c0_3 = arith.constant 0 : index
    %c0_4 = arith.constant 0 : index
    %9 = vector.load %arg2[%c0_3, %c0_4] : memref<2x1xf32, #tpu.memory_space<vmem>>, vector<2x1xf32>
    %cst_5 = arith.constant 4.000000e+00 : f32
    %10 = vector.broadcast %cst_5 : f32 to vector<2x1xf32>
    %11 = arith.mulf %9, %10 : vector<2x1xf32>
    %12 = vector.broadcast %11 : vector<2x1xf32> to vector<2x128xf32>
    %13 = vector.broadcast %8 : vector<1x128xf32> to vector<2x128xf32>
    %14 = arith.addf %12, %13 : vector<2x128xf32>
    %15 = vector.broadcast %0 : vector<1x128xf32> to vector<2x128xf32>
    %16 = arith.mulf %14, %15 : vector<2x128xf32>
    %17 = math.cos %16 : vector<2x128xf32>
    %18 = math.sin %16 : vector<2x128xf32>
    %19 = vector.shape_cast %4 : vector<1x128xi1> to vector<1x128xi1>
    %20 = vector.broadcast %19 : vector<1x128xi1> to vector<2x128xi1>
    %21 = arith.select %20, %17, %18 : vector<2x128xi1>, vector<2x128xf32>
    %c0_6 = arith.constant 0 : index
    %c0_7 = arith.constant 0 : index
    %22 = vector.load %arg3[%c0_6, %c0_7] : memref<2x128xf32, #tpu.memory_space<vmem>>, vector<2x128xf32>
    tpu.vector_store %arg3[%c0_6, %c0_7], %21 {strides = array<i32>} : memref<2x128xf32, #tpu.memory_space<vmem>>, vector<2x128xf32>,
    %c0_i32 = arith.constant 0 : i32
    %23 = arith.cmpi eq, %arg0, %c0_i32 : i32
    %24 = arith.extui %23 : i1 to i32
    %c0_i32_8 = arith.constant 0 : i32
    %25 = arith.cmpi ne, %24, %c0_i32_8 : i32
    scf.if %25 {
      %cst_9 = arith.constant 0.000000e+00 : f32
      %26 = vector.broadcast %cst_9 : f32 to vector<1x32xf32>
      %c0_10 = arith.constant 0 : index
      %c0_11 = arith.constant 0 : index
      %27 = vector.load %arg3[%c0_10, %c0_11] : memref<2x128xf32, #tpu.memory_space<vmem>>, vector<1x32xf32>
      tpu.vector_store %arg3[%c0_10, %c0_11], %26 {strides = array<i32>} : memref<2x128xf32, #tpu.memory_space<vmem>>, vector<1x32xf32>,
    } else {
    }
    return
  }
  func.func @transform_0(%arg0: i32) -> (i32, i32) {
    %c0_i32 = arith.constant 0 : i32
    %c0_i32_0 = arith.constant 0 : i32
    %c0_i32_1 = arith.constant 0 : i32
    return %c0_i32, %c0_i32_0 : i32, i32
  }
  func.func @transform_1(%arg0: i32) -> (i32, i32) {
    %c0_i32 = arith.constant 0 : i32
    %c0_i32_0 = arith.constant 0 : i32
    %c0_i32_1 = arith.constant 0 : i32
    return %c0_i32, %c0_i32_0 : i32, i32
  }
  func.func @transform_2(%arg0: i32) -> (i32, i32) {
    %c0_i32 = arith.constant 0 : i32
    %c0_i32_0 = arith.constant 0 : i32
    return %arg0, %c0_i32 : i32, i32
  }
}

</mosaic_0001>

<llo_original>
// kernel: tpu_custom_call.1
$region0: #{tpu_custom_call.1}
  #allocation0 [shape = 'u32[]', space=smem, size = 0x4, offset = 0x4, fixed_abs, tag = 'smem constant byte address 0x4 - core index']
  #allocation1 [shape = 'u32[72,128]{1,0:T(1,128)}', space=vmem, size = 0x9000, scoped, tag = 'internal scratch']
  %s0 = inlined_call_operand.hbm [shape: f32[3,128], index: 0, kind: input, shape index: {}]
  %s1 = inlined_call_operand.vmem [shape: f32[2,1], index: 1, kind: input, shape index: {}]
  %s2 = inlined_call_operand.hbm [shape: f32[2,128], index: 2, kind: output, shape index: {}]
  %s3 = sld [smem:[#allocation0]]
  $region26: #{tpu_custom_call.1} parent=0
    _
  %s5 = ssub.s32 1, %s3
  %s6 = scalar_select 0, %s5, %s3
  $region1: #{tpu_custom_call.1} parent=0
    #allocation2 [shape = 'u8[2048]{0}', space=vmem, size = 0x800, scoped, tag = 'input window, operand 0, single buffered']
    #allocation3 [shape = 's32[1]{0}', space=sflag, size = 0x4, scoped, tag = 'scoped memory for tpu_custom_call.1']
    #allocation4 [shape = 's32[1]{0}', space=sflag, size = 0x4, scoped, tag = 'scoped memory for tpu_custom_call.1']
    #allocation5 [shape = 'u8[1024]{0}', space=vmem, size = 0x400, scoped, tag = 'output window, operand 0, single buffered']
    %7 = vsyncpa [#allocation3], 0
    %8 = vsyncpa [#allocation4], 0
    // Predicated region
    $region2: #{tpu_custom_call.1} parent=1 // pred_check
      _
    $region3: #{tpu_custom_call.1} parent=1 // pred_check_branch
      %10 = sbr.rel (0) target = $region5
    $region4: #{tpu_custom_call.1} parent=1 // pred_region
      %12 = vsyncadd [#allocation3], 0
      %s14 = sshll.u32 %s0, 4
      %s15 = int_to_ptr.hbm [resolvable:$true] %s14
      %s16 = sshll.u32 [#allocation2], 4
      %s17 = int_to_ptr.vmem [resolvable:$true] %s16
      %19 = dma.hbm_to_vmem [thread:$0]  %s15, 64, %s17, [#allocation3]
    $region5: #{tpu_custom_call.1} parent=1 // pred_fallthru
      _
    // Predicated region
    $region6: #{tpu_custom_call.1} parent=1 // pred_check
      _
    $region7: #{tpu_custom_call.1} parent=1 // pred_check_branch
      %21 = sbr.rel (0) target = $region9
    $region8: #{tpu_custom_call.1} parent=1 // pred_region
      _
    $region9: #{tpu_custom_call.1} parent=1 // pred_fallthru
      _
    // Predicated region
    $region10: #{tpu_custom_call.1} parent=1 // pred_check
      _
    $region11: #{tpu_custom_call.1} parent=1 // pred_check_branch
      %23 = sbr.rel (0) target = $region13
    $region12: #{tpu_custom_call.1} parent=1 // pred_region
      %25 = dma.done [#allocation3], 64
    $region13: #{tpu_custom_call.1} parent=1 // pred_fallthru
      _
    %v26 = vld [vmem:[#allocation2] sm:$0x1]
    %v27 = vld [vmem:[#allocation2 + $0x1] sm:$0x1]
    %v28 = vld [vmem:[#allocation2 + $0x2] sm:$0x1]
    %vm29 = vcmp.gt.f32.partialorder %v28, 0.5
    %s30 = smul.u32 0, 8
    %s31 = scvt.s32.f32 %s30
    %v32 = vstv %s31
    %v33 = vadd.f32 %v27, %v32
    %v34 = vld [vmem:[%s1] sm:$0x3]
    %v35 = vmul.f32 %v34, 4.0
    %37 = vset.pattern.permute.xlu0 0
    %38 = vperm.xlu0 %37, %v35
    %v39 = vpop.permute.xlu0 %38
    %v41 = vperm.slane %v33, 0
    %v42 = vadd.f32 %v39, %v41
    %v43 = vperm.slane %v26, 0
    %v44 = vmul.f32 %v42, %v43
    %v45 = vand.u32 2147483647, %v44
    %vm46 = vcmp.le.f32.partialorder %v45, 0.7853982
    %vm47 = vcmp.lt.s32.totalorder %v44, 0
    %v48 = vand.u32 %v44, 2139095040
    %v49 = vshrl.u32 %v48, 23
    %v50 = vsub.s32 %v49, 127
    %v51 = vand.u32 2147483647, %v44
    %v52 = vand.u32 %v51, 8388607
    %v53 = vor.u32 %v52, 8388608
    %v54 = vsub.s32 0, %v53
    %v55 = vadd.s32 %v50, 1
    %vm56 = vcmp.gt.s32.totalorder %v55, 0
    %v57 = vsel %vm56, %v55, 0
    %v58 = vshrl.u32 %v57, 5
    %v59 = vand.u32 %v57, 31
    %v60 = vsub.s32 32, %v59
    %v61 = vshrl.u32 683565275, %v60
    %v62 = vshll.u32 683565275, %v59
    %v63 = vshrl.u32 2475754826, %v60
    %v64 = vor.u32 %v62, %v63
    %v65 = vshll.u32 2475754826, %v59
    %v66 = vshrl.u32 2131351028, %v60
    %v67 = vor.u32 %v65, %v66
    %v68 = vshll.u32 2131351028, %v59
    %v69 = vshrl.u32 2102212464, %v60
    %v70 = vor.u32 %v68, %v69
    %v71 = vshll.u32 2102212464, %v59
    %v72 = vshrl.u32 920167782, %v60
    %v73 = vor.u32 %v71, %v72
    %v74 = vshll.u32 920167782, %v59
    %v75 = vshrl.u32 1326507024, %v60
    %v76 = vor.u32 %v74, %v75
    %vm77 = vcmp.lt.s32.totalorder %v58, 1
    %vm78 = vcmp.lt.s32.totalorder %v58, 2
    %vm79 = vcmp.lt.s32.totalorder %v58, 3
    %vm80 = vcmp.lt.s32.totalorder %v58, 4
    %v81 = vsel %vm77, %v61, %v64
    %v82 = vsel %vm80, %v70, 2102212464
    %v83 = vsel %vm79, %v67, %v82
    %v84 = vsel %vm78, %v81, %v83
    %v85 = vsel %vm77, %v64, %v67
    %v86 = vsel %vm80, %v73, 920167782
    %v87 = vsel %vm79, %v70, %v86
    %v88 = vsel %vm78, %v85, %v87
    %v89 = vsel %vm77, %v67, %v70
    %v90 = vsel %vm80, %v76, 1326507024
    %v91 = vsel %vm79, %v73, %v90
    %v92 = vsel %vm78, %v89, %v91
    %v93 = vshll.u32 %v53, 8
    %v94 = vand.u32 %v93, 65535
    %v95 = vshrl.u32 %v93, 16
    %v96 = vand.u32 %v92, 65535
    %v97 = vshrl.u32 %v92, 16
    %v98 = vmul.u32 %v94, %v96
    %v99 = vmul.u32 %v94, %v97
    %v100 = vmul.u32 %v95, %v96
    %v101 = vmul.u32 %v95, %v97
    %v102 = vshll.u32 %v99, 16
    %v103 = vshrl.u32 %v99, 16
    %v104 = vshll.u32 %v100, 16
    %v105 = vshrl.u32 %v100, 16
    %vm106 = vc.u32 %v98, %v102
    %v107 = vsel %vm106, 1, 0
    %v108 = vadd.s32 %v98, %v102
    %v109 = vadd.s32 %v101, %v107
    %vm110 = vc.u32 %v108, %v104
    %v111 = vsel %vm110, 1, 0
    %v112 = vadd.s32 %v108, %v104
    %v113 = vadd.s32 %v109, %v111
    %v114 = vadd.s32 %v113, %v103
    %v115 = vadd.s32 %v114, %v105
    %v116 = vand.u32 %v93, 65535
    %v117 = vshrl.u32 %v93, 16
    %v118 = vand.u32 %v88, 65535
    %v119 = vshrl.u32 %v88, 16
    %v120 = vmul.u32 %v116, %v118
    %v121 = vmul.u32 %v116, %v119
    %v122 = vmul.u32 %v117, %v118
    %v123 = vmul.u32 %v117, %v119
    %v124 = vshll.u32 %v121, 16
    %v125 = vshrl.u32 %v121, 16
    %v126 = vshll.u32 %v122, 16
    %v127 = vshrl.u32 %v122, 16
    %vm128 = vc.u32 %v120, %v124
    %v129 = vsel %vm128, 1, 0
    %v130 = vadd.s32 %v120, %v124
    %v131 = vadd.s32 %v123, %v129
    %vm132 = vc.u32 %v130, %v126
    %v133 = vsel %vm132, 1, 0
    %v134 = vadd.s32 %v130, %v126
    %v135 = vadd.s32 %v131, %v133
    %v136 = vadd.s32 %v135, %v125
    %v137 = vadd.s32 %v136, %v127
    %v138 = vmul.u32 %v93, %v84
    %v139 = vadd.s32 %v115, %v134
    %vm140 = vc.u32 %v115, %v134
    %v141 = vadd.s32 %v137, 1
    %v142 = vsel %vm140, %v141, %v137
    %v143 = vadd.s32 %v138, %v142
    %v144 = vadd.s32 %v143, 536870912
    %v145 = vshrl.u32 %v144, 30
    %v146 = vshll.u32 %v145, 30
    %v147 = vsub.s32 %v143, %v146
    %vm148 = vcmp.lt.s32.totalorder %v147, 0
    %v149 = vsub.s32 0, %v147
    %v150 = vsel %vm148, %v149, %v147
    %v151 = vclz %v150
    %v152 = vsub.s32 %v151, 2
    %vm153 = vcmp.gt.s32.totalorder 0, %v152
    %v154 = vsel %vm153, 0, %v152
    %v155 = vsub.s32 32, %v154
    %v156 = vshll.u32 %v147, %v154
    %v157 = vshrl.u32 %v139, %v155
    %v158 = vor.u32 %v156, %v157
    %v159 = vsub.s32 4294967266, %v154
    %v160 = vadd.s32 %v159, 127
    %v161 = vshll.u32 %v160, 23
    %v162 = vor.u32 4788187, %v161
    %v163 = vand.u32 2147483647, %v162
    %v165 = vcvt.s32.f32 %v158
    %v166 = vmul.f32 %v165, %v163
    %v167 = vxor.u32 %v166, 2147483648
    %v168 = vsel %vm47, %v167, %v166
    %v169 = vsub.s32 4, %v145
    %v170 = vsel %vm47, %v169, %v145
    %v171 = vsel %vm46, %v44, %v168
    %v172 = vsel %vm46, 0, %v170
    %v173 = vmul.f32 %v171, %v171
    %v174 = vmul.f32 %v173, -0.001358992
    %v175 = vadd.f32 %v174, 0.041655596
    %v176 = vmul.f32 %v173, %v175
    %v177 = vadd.f32 %v176, -0.4999988
    %v178 = vmul.f32 %v173, %v177
    %v179 = vadd.f32 1.0, %v178
    %v180 = vmul.f32 %v171, %v171
    %v181 = vmul.f32 %v180, -0.00019511016
    %v182 = vadd.f32 %v181, 0.008332121
    %v183 = vmul.f32 %v180, %v182
    %v184 = vadd.f32 %v183, -0.16666654
    %v185 = vmul.f32 %v180, %v184
    %v186 = vadd.f32 %v185, 1.0
    %v187 = vmul.f32 %v186, %v171
    %vm188 = vweird.f32 %v44
    %v189 = vand.u32 %v172, 3
    %vm190 = vcmp.lt.s32.totalorder %v189, 2
    %vm191 = vcmp.eq.s32.totalorder %v189, 0
    %v192 = vxor.u32 %v187, 2147483648
    %v193 = vsel %vm191, %v179, %v192
    %vm194 = vcmp.eq.s32.totalorder %v189, 2
    %v195 = vxor.u32 %v179, 2147483648
    %v196 = vsel %vm194, %v195, %v187
    %v197 = vsel %vm190, %v193, %v196
    %v198 = vsel %vm188, nan, %v197
    %v199 = vand.u32 2147483647, %v44
    %vm200 = vcmp.le.f32.partialorder %v199, 0.7853982
    %vm201 = vcmp.lt.s32.totalorder %v44, 0
    %v202 = vand.u32 %v44, 2139095040
    %v203 = vshrl.u32 %v202, 23
    %v204 = vsub.s32 %v203, 127
    %v205 = vand.u32 2147483647, %v44
    %v206 = vand.u32 %v205, 8388607
    %v207 = vor.u32 %v206, 8388608
    %v208 = vsub.s32 0, %v207
    %v209 = vadd.s32 %v204, 1
    %vm210 = vcmp.gt.s32.totalorder %v209, 0
    %v211 = vsel %vm210, %v209, 0
    %v212 = vshrl.u32 %v211, 5
    %v213 = vand.u32 %v211, 31
    %v214 = vsub.s32 32, %v213
    %v215 = vshrl.u32 683565275, %v214
    %v216 = vshll.u32 683565275, %v213
    %v217 = vshrl.u32 2475754826, %v214
    %v218 = vor.u32 %v216, %v217
    %v219 = vshll.u32 2475754826, %v213
    %v220 = vshrl.u32 2131351028, %v214
    %v221 = vor.u32 %v219, %v220
    %v222 = vshll.u32 2131351028, %v213
    %v223 = vshrl.u32 2102212464, %v214
    %v224 = vor.u32 %v222, %v223
    %v225 = vshll.u32 2102212464, %v213
    %v226 = vshrl.u32 920167782, %v214
    %v227 = vor.u32 %v225, %v226
    %v228 = vshll.u32 920167782, %v213
    %v229 = vshrl.u32 1326507024, %v214
    %v230 = vor.u32 %v228, %v229
    %vm231 = vcmp.lt.s32.totalorder %v212, 1
    %vm232 = vcmp.lt.s32.totalorder %v212, 2
    %vm233 = vcmp.lt.s32.totalorder %v212, 3
    %vm234 = vcmp.lt.s32.totalorder %v212, 4
    %v235 = vsel %vm231, %v215, %v218
    %v236 = vsel %vm234, %v224, 2102212464
    %v237 = vsel %vm233, %v221, %v236
    %v238 = vsel %vm232, %v235, %v237
    %v239 = vsel %vm231, %v218, %v221
    %v240 = vsel %vm234, %v227, 920167782
    %v241 = vsel %vm233, %v224, %v240
    %v242 = vsel %vm232, %v239, %v241
    %v243 = vsel %vm231, %v221, %v224
    %v244 = vsel %vm234, %v230, 1326507024
    %v245 = vsel %vm233, %v227, %v244
    %v246 = vsel %vm232, %v243, %v245
    %v247 = vshll.u32 %v207, 8
    %v248 = vand.u32 %v247, 65535
    %v249 = vshrl.u32 %v247, 16
    %v250 = vand.u32 %v246, 65535
    %v251 = vshrl.u32 %v246, 16
    %v252 = vmul.u32 %v248, %v250
    %v253 = vmul.u32 %v248, %v251
    %v254 = vmul.u32 %v249, %v250
    %v255 = vmul.u32 %v249, %v251
    %v256 = vshll.u32 %v253, 16
    %v257 = vshrl.u32 %v253, 16
    %v258 = vshll.u32 %v254, 16
    %v259 = vshrl.u32 %v254, 16
    %vm260 = vc.u32 %v252, %v256
    %v261 = vsel %vm260, 1, 0
    %v262 = vadd.s32 %v252, %v256
    %v263 = vadd.s32 %v255, %v261
    %vm264 = vc.u32 %v262, %v258
    %v265 = vsel %vm264, 1, 0
    %v266 = vadd.s32 %v262, %v258
    %v267 = vadd.s32 %v263, %v265
    %v268 = vadd.s32 %v267, %v257
    %v269 = vadd.s32 %v268, %v259
    %v270 = vand.u32 %v247, 65535
    %v271 = vshrl.u32 %v247, 16
    %v272 = vand.u32 %v242, 65535
    %v273 = vshrl.u32 %v242, 16
    %v274 = vmul.u32 %v270, %v272
    %v275 = vmul.u32 %v270, %v273
    %v276 = vmul.u32 %v271, %v272
    %v277 = vmul.u32 %v271, %v273
    %v278 = vshll.u32 %v275, 16
    %v279 = vshrl.u32 %v275, 16
    %v280 = vshll.u32 %v276, 16
    %v281 = vshrl.u32 %v276, 16
    %vm282 = vc.u32 %v274, %v278
    %v283 = vsel %vm282, 1, 0
    %v284 = vadd.s32 %v274, %v278
    %v285 = vadd.s32 %v277, %v283
    %vm286 = vc.u32 %v284, %v280
    %v287 = vsel %vm286, 1, 0
    %v288 = vadd.s32 %v284, %v280
    %v289 = vadd.s32 %v285, %v287
    %v290 = vadd.s32 %v289, %v279
    %v291 = vadd.s32 %v290, %v281
    %v292 = vmul.u32 %v247, %v238
    %v293 = vadd.s32 %v269, %v288
    %vm294 = vc.u32 %v269, %v288
    %v295 = vadd.s32 %v291, 1
    %v296 = vsel %vm294, %v295, %v291
    %v297 = vadd.s32 %v292, %v296
    %v298 = vadd.s32 %v297, 536870912
    %v299 = vshrl.u32 %v298, 30
    %v300 = vshll.u32 %v299, 30
    %v301 = vsub.s32 %v297, %v300
    %vm302 = vcmp.lt.s32.totalorder %v301, 0
    %v303 = vsub.s32 0, %v301
    %v304 = vsel %vm302, %v303, %v301
    %v305 = vclz %v304
    %v306 = vsub.s32 %v305, 2
    %vm307 = vcmp.gt.s32.totalorder 0, %v306
    %v308 = vsel %vm307, 0, %v306
    %v309 = vsub.s32 32, %v308
    %v310 = vshll.u32 %v301, %v308
    %v311 = vshrl.u32 %v293, %v309
    %v312 = vor.u32 %v310, %v311
    %v313 = vsub.s32 4294967266, %v308
    %v314 = vadd.s32 %v313, 127
    %v315 = vshll.u32 %v314, 23
    %v316 = vor.u32 4788187, %v315
    %v317 = vand.u32 2147483647, %v316
    %v319 = vcvt.s32.f32 %v312
    %v320 = vmul.f32 %v319, %v317
    %v321 = vxor.u32 %v320, 2147483648
    %v322 = vsel %vm201, %v321, %v320
    %v323 = vsub.s32 4, %v299
    %v324 = vsel %vm201, %v323, %v299
    %v325 = vsel %vm200, %v44, %v322
    %v326 = vsel %vm200, 0, %v324
    %v327 = vmul.f32 %v325, %v325
    %v328 = vmul.f32 %v327, -0.001358992
    %v329 = vadd.f32 %v328, 0.041655596
    %v330 = vmul.f32 %v327, %v329
    %v331 = vadd.f32 %v330, -0.4999988
    %v332 = vmul.f32 %v327, %v331
    %v333 = vadd.f32 1.0, %v332
    %v334 = vmul.f32 %v325, %v325
    %v335 = vmul.f32 %v334, -0.00019511016
    %v336 = vadd.f32 %v335, 0.008332121
    %v337 = vmul.f32 %v334, %v336
    %v338 = vadd.f32 %v337, -0.16666654
    %v339 = vmul.f32 %v334, %v338
    %v340 = vadd.f32 %v339, 1.0
    %v341 = vmul.f32 %v340, %v325
    %vm342 = vweird.f32 %v44
    %v343 = vadd.s32 %v326, 3
    %v344 = vand.u32 %v343, 3
    %vm345 = vcmp.lt.s32.totalorder %v344, 2
    %vm346 = vcmp.eq.s32.totalorder %v344, 0
    %v347 = vxor.u32 %v341, 2147483648
    %v348 = vsel %vm346, %v333, %v347
    %vm349 = vcmp.eq.s32.totalorder %v344, 2
    %v350 = vxor.u32 %v333, 2147483648
    %v351 = vsel %vm349, %v350, %v341
    %v352 = vsel %vm345, %v348, %v351
    %v353 = vsel %vm342, nan, %v352
    %v354 = vsel %vm29, 1, 0
    %v355 = vperm.slane %v354, 0
    %vm356 = vcmp.eq.s32.totalorder %v355, 1
    %v357 = vsel %vm356, %v198, %v353
    %358 = vst [vmem:[#allocation5] sm:$0x3] %v357
    %p359 = scmp.eq.s32.totalorder 0, 0
    // Predicated region
    $region14: #{tpu_custom_call.1} parent=1 // pred_check
      %p360 = pneg %p359
    $region15: #{tpu_custom_call.1} parent=1 // pred_check_branch
      %362 = sbr.rel (%p360) target = $region17
    $region16: #{tpu_custom_call.1} parent=1 // pred_region
      %vm363 = vcmask 253952
      %364 = vst.msk [vmem:[#allocation5] sm:$0x1] %vm363, 0.0
    $region17: #{tpu_custom_call.1} parent=1 // pred_fallthru
      _
    // Predicated region
    $region18: #{tpu_custom_call.1} parent=1 // pred_check
      _
    $region19: #{tpu_custom_call.1} parent=1 // pred_check_branch
      %366 = sbr.rel (0) target = $region21
    $region20: #{tpu_custom_call.1} parent=1 // pred_region
      %368 = vsyncadd [#allocation4], 0
      %s370 = sshll.u32 [#allocation5], 4
      %s371 = int_to_ptr.vmem [resolvable:$true] %s370
      %s372 = sshll.u32 %s2, 4
      %s373 = int_to_ptr.hbm [resolvable:$true] %s372
      %375 = dma.vmem_to_hbm [thread:$0]  %s371, 32, %s373, [#allocation4]
    $region21: #{tpu_custom_call.1} parent=1 // pred_fallthru
      _
    // Predicated region
    $region22: #{tpu_custom_call.1} parent=1 // pred_check
      _
    $region23: #{tpu_custom_call.1} parent=1 // pred_check_branch
      %377 = sbr.rel (0) target = $region25
    $region24: #{tpu_custom_call.1} parent=1 // pred_region
      %379 = dma.done [#allocation4], 32
    $region25: #{tpu_custom_call.1} parent=1 // pred_fallthru
      _
    %380 = vsyncpa [#allocation3], 1
    %381 = vsyncpa [#allocation4], 1

</llo_original>
